<compile_context>
chip_gen: v7x
topology: tpu7x:2x2x1
jax: 0.10.0
libtpu: 0.0.40
codegen_flags: <defaults>
</compile_context>

<pallas_src>
import functools

import jax
import jax.numpy as jnp
from jax.experimental import pallas as pl
from jax.experimental.pallas import tpu as pltpu

EPS = 1e-5
LANE = 128
VMEM_LIMIT = 28 * 1024 * 1024  # safe on v5e/v6e/v7x scoped-VMEM budgets


def _round_up(x, m):
    return (x + m - 1) // m * m


# --------------------- pass 1: fused matmul + bias + BN stats ---------------------
def _matmul_stats_kernel(taps_ref, w_ref, b_ref, z_ref, stats_ref, *, m_true):
    i = pl.program_id(0)
    tm = z_ref.shape[0]

    @pl.when(i == 0)
    def _():
        stats_ref[...] = jnp.zeros_like(stats_ref)

    # single big MXU matmul: [TM, Kp](bf16) x [Kp, Cop](bf16) -> f32
    acc = jnp.dot(taps_ref[...], w_ref[...], preferred_element_type=jnp.float32)
    acc = acc + b_ref[...]                                   # conv bias, [1, Cop]

    # row-validity mask (handles M padding) + MXU-routed axis-0 reduction
    row = i * tm + jax.lax.broadcasted_iota(jnp.int32, (1, tm), 1)
    mask = (row < m_true).astype(jnp.float32)                # [1, TM]
    s1 = jnp.dot(mask, acc, preferred_element_type=jnp.float32)        # sum
    s2 = jnp.dot(mask, acc * acc, preferred_element_type=jnp.float32)  # sum of squares
    stats_ref[...] += jnp.concatenate([s1, s2], axis=0)      # [2, Cop] accumulator

    z_ref[...] = acc


# ----------------- pass 2: normalize + affine + residual + ReLU -------------------
def _bn_act_kernel(*refs, m_true, relu, has_res):
    if has_res:
        z_ref, stats_ref, gamma_ref, beta_ref, res_ref, out_ref = refs
    else:
        z_ref, stats_ref, gamma_ref, beta_ref, out_ref = refs
        res_ref = None

    inv_m = 1.0 / float(m_true)
    mean = stats_ref[0:1, :] * inv_m
    var = jnp.maximum(stats_ref[1:2, :] * inv_m - mean * mean, 0.0)
    scale = gamma_ref[...] * jax.lax.rsqrt(var + EPS)
    shift = beta_ref[...] - mean * scale

    y = z_ref[...] * scale + shift
    if has_res:
        y = y + res_ref[...]
    if relu:
        y = jnp.maximum(y, 0.0)
    out_ref[...] = y.astype(out_ref.dtype)


# --------------------------------- wrapper ----------------------------------------
def conv_bn_pallas(taps, w_mat, bias, gamma, beta, *, relu, residual=None,
                   out_dtype=jnp.float32, block_m=256):
    """taps: [M, K] im2col slab; w_mat: [K, Co]. Returns BN(conv)+(res)+(ReLU): [M, Co]."""
    m_true, k = taps.shape
    k2, co = w_mat.shape
    assert k == k2
    kp = _round_up(k, LANE)
    cop = _round_up(co, LANE)
    tm = min(_round_up(block_m, 8), _round_up(m_true, 8))
    m_pad = _round_up(m_true, tm)
    grid_m = m_pad // tm

    # channel / row padding (lane-dense) + bf16 cast of the matmul operands
    taps_p = jnp.zeros((m_pad, kp), jnp.bfloat16).at[:m_true, :k].set(
        taps.astype(jnp.bfloat16))
    w_p = jnp.zeros((kp, cop), jnp.bfloat16).at[:k, :co].set(
        w_mat.astype(jnp.bfloat16))
    b_p = jnp.zeros((1, cop), jnp.float32).at[0, :co].set(bias.astype(jnp.float32))
    g_p = jnp.zeros((1, cop), jnp.float32).at[0, :co].set(gamma.astype(jnp.float32))
    be_p = jnp.zeros((1, cop), jnp.float32).at[0, :co].set(beta.astype(jnp.float32))

    # ----- pass 1: tiled matmul + bias + global per-channel stats -----
    cost1 = pl.CostEstimate(
        flops=2 * m_pad * kp * cop + 5 * m_pad * cop,
        transcendentals=0,
        bytes_accessed=m_pad * kp * 2 + kp * cop * 2 + m_pad * cop * 4 + 4 * cop * 4)
    z, stats = pl.pallas_call(
        functools.partial(_matmul_stats_kernel, m_true=m_true),
        out_shape=(jax.ShapeDtypeStruct((m_pad, cop), jnp.float32),
                   jax.ShapeDtypeStruct((2, cop), jnp.float32)),
        grid=(grid_m,),
        in_specs=[pl.BlockSpec((tm, kp), lambda i: (i, 0)),
                  pl.BlockSpec((kp, cop), lambda i: (0, 0)),
                  pl.BlockSpec((1, cop), lambda i: (0, 0))],
        out_specs=(pl.BlockSpec((tm, cop), lambda i: (i, 0)),
                   pl.BlockSpec((2, cop), lambda i: (0, 0))),
        compiler_params=pltpu.CompilerParams(
            dimension_semantics=("arbitrary",),       # stats accumulator is carried
            vmem_limit_bytes=VMEM_LIMIT),
        cost_estimate=cost1,
    )(taps_p, w_p, b_p)

    # ----- pass 2: normalize with global stats + residual + ReLU -----
    inputs2 = [z, stats, g_p, be_p]
    in_specs2 = [pl.BlockSpec((tm, cop), lambda i: (i, 0)),
                 pl.BlockSpec((2, cop), lambda i: (0, 0)),
                 pl.BlockSpec((1, cop), lambda i: (0, 0)),
                 pl.BlockSpec((1, cop), lambda i: (0, 0))]
    has_res = residual is not None
    if has_res:
        res_p = jnp.zeros((m_pad, cop), jnp.float32).at[:m_true, :co].set(
            residual.astype(jnp.float32))
        inputs2.append(res_p)
        in_specs2.append(pl.BlockSpec((tm, cop), lambda i: (i, 0)))

    cost2 = pl.CostEstimate(
        flops=6 * m_pad * cop,
        transcendentals=grid_m * cop,
        bytes_accessed=m_pad * cop * 4 * (2 + int(has_res)) + 4 * cop * 4)
    out = pl.pallas_call(
        functools.partial(_bn_act_kernel, m_true=m_true, relu=relu, has_res=has_res),
        out_shape=jax.ShapeDtypeStruct((m_pad, cop), out_dtype),
        grid=(grid_m,),
        in_specs=in_specs2,
        out_specs=pl.BlockSpec((tm, cop), lambda i: (i, 0)),
        compiler_params=pltpu.CompilerParams(
            dimension_semantics=("parallel",),        # independent tiles -> megacore
            vmem_limit_bytes=VMEM_LIMIT),
        cost_estimate=cost2,
    )(*inputs2)
    return out[:m_true, :co]


# ----------------------------------- glue ------------------------------------------
def tap_views(xp_nhwc, stride, ho, wo):
    """xp_nhwc is the zero-padded NHWC input; returns [N*ho*wo, 9*C] (taps concatenated)."""
    c = xp_nhwc.shape[-1]
    views = []
    for kh in range(3):
        for kw in range(3):
            v = xp_nhwc[:, kh:kh + stride * (ho - 1) + 1:stride,
                           kw:kw + stride * (wo - 1) + 1:stride, :]
            views.append(v.reshape(-1, c))
    return jnp.concatenate(views, axis=1)


def oihw_to_mat(w_oihw):
    """[O, I, kh, kw] -> [kh*kw*I, O] with row order (kh, kw, ci) matching tap_views."""
    o, i, kh, kw = w_oihw.shape
    return jnp.transpose(w_oihw, (2, 3, 1, 0)).reshape(kh * kw * i, o)


def basic_block_forward(x_nchw, p, s, block_m=256):
    n, ci, h, w = x_nchw.shape
    co = p['w1'].shape[0]
    ho = (h + 2 - 3) // s + 1
    wo = (w + 2 - 3) // s + 1
    m = n * ho * wo
    x_nhwc = jnp.transpose(x_nchw, (0, 2, 3, 1))

    # ---- identity / projection shortcut ----
    if s == 2:
        x_sub = x_nhwc[:, ::2, ::2, :]                          # 1x1 conv, stride 2
        taps_id = x_sub.reshape(m, ci)
        identity = conv_bn_pallas(taps_id, oihw_to_mat(p['wi']), p['bi'],
                                  p['gamma_i'], p['beta_i'], relu=False,
                                  block_m=block_m)
    else:
        assert ci == co, "stride-1 basic_block requires i == o for the residual add"
        identity = x_nhwc.reshape(m, co)

    # ---- conv1 (3x3, stride s, pad 1) + bn + relu (z1 kept in bf16) ----
    xp = jnp.pad(x_nhwc, ((0, 0), (1, 1), (1, 1), (0, 0)))
    taps1 = tap_views(xp, s, ho, wo)
    z1 = conv_bn_pallas(taps1, oihw_to_mat(p['w1']), p['b1'],
                        p['gamma'], p['beta'], relu=True,
                        out_dtype=jnp.bfloat16, block_m=block_m)

    # ---- conv2 (3x3, stride 1, 'same') + bn (same module) + residual + relu ----
    z1p = jnp.pad(z1.reshape(n, ho, wo, co), ((0, 0), (1, 1), (1, 1), (0, 0)))
    taps2 = tap_views(z1p, 1, ho, wo)
    out = conv_bn_pallas(taps2, oihw_to_mat(p['w2']), p['b2'],
                         p['gamma'], p['beta'], relu=True,
                         residual=identity, block_m=block_m)
    return out.reshape(n, ho, wo, co).transpose(0, 3, 1, 2)      # back to NCHW


# ---------------------------- pure-JAX reference ------------------------------------
def _conv_ref(x, w, b, stride, pad):
    out = jax.lax.conv_general_dilated(
        x, w, (stride, stride), [(pad, pad), (pad, pad)],
        dimension_numbers=('NCHW', 'OIHW', 'NCHW'))
    return out + b.reshape(1, -1, 1, 1)


def _bn_ref(x, gamma, beta):
    mean = jnp.mean(x, axis=(0, 2, 3), keepdims=True)
    var = jnp.mean((x - mean) ** 2, axis=(0, 2, 3), keepdims=True)
    return (x - mean) * jax.lax.rsqrt(var + EPS) * gamma.reshape(1, -1, 1, 1) \
        + beta.reshape(1, -1, 1, 1)


def ref_forward(x, p, s):
    if s == 2:
        idt = _bn_ref(_conv_ref(x, p['wi'], p['bi'], 2, 0), p['gamma_i'], p['beta_i'])
    else:
        idt = x
    out = _conv_ref(x, p['w1'], p['b1'], s, 1)
    out = _bn_ref(out, p['gamma'], p['beta'])
    out = jnp.maximum(out, 0.0)
    out = _conv_ref(out, p['w2'], p['b2'], 1, 1)
    out = _bn_ref(out, p['gamma'], p['beta'])
    out = out + idt
    return jnp.maximum(out, 0.0)


# ------------------------------------ main ------------------------------------------
def init_params(key, ci, co, s):
    ks = jax.random.split(key, 10)
    p = {
        'w1': jax.random.normal(ks[0], (co, ci, 3, 3), jnp.float32) * 0.2,
        'b1': jax.random.normal(ks[1], (co,), jnp.float32) * 0.1,
        'w2': jax.random.normal(ks[2], (co, co, 3, 3), jnp.float32) * 0.2,
        'b2': jax.random.normal(ks[3], (co,), jnp.float32) * 0.1,
        'gamma': 1.0 + 0.1 * jax.random.normal(ks[4], (co,), jnp.float32),
        'beta': 0.1 * jax.random.normal(ks[5], (co,), jnp.float32),
    }
    if s == 2:
        p['wi'] = jax.random.normal(ks[6], (co, ci, 1, 1), jnp.float32) * 0.2
        p['bi'] = jax.random.normal(ks[7], (co,), jnp.float32) * 0.1
        p['gamma_i'] = 1.0 + 0.1 * jax.random.normal(ks[8], (co,), jnp.float32)
        p['beta_i'] = 0.1 * jax.random.normal(ks[9], (co,), jnp.float32)
    return p


if __name__ == "__main__":
    key = jax.random.PRNGKey(0)
    kx, kx2, kp, kp2 = jax.random.split(key, 4)

    # case 1: stride-2 block with projection shortcut (i=4 -> o=8); M=128 -> 1 tile
    x = jax.random.normal(kx, (2, 4, 16, 16), jnp.float32)
    p = init_params(kp, 4, 8, 2)
    out = jax.block_until_ready(basic_block_forward(x, p, s=2))
    ref = ref_forward(x, p, 2)
    assert out.shape == (2, 8, 8, 8)
    assert jnp.allclose(out, ref, atol=5e-2, rtol=5e-2), float(jnp.max(jnp.abs(out - ref)))

    # case 2: stride-1 block with identity shortcut (i=o=8); M=512 -> 2 tiles (tests
    # the cross-tile BN-statistics accumulation path)
    x2 = jax.random.normal(kx2, (2, 8, 16, 16), jnp.float32)
    p2 = init_params(kp2, 8, 8, 1)
    out2 = jax.block_until_ready(basic_block_forward(x2, p2, s=1))
    ref2 = ref_forward(x2, p2, 1)
    assert out2.shape == (2, 8, 16, 16)
    assert jnp.allclose(out2, ref2, atol=5e-2, rtol=5e-2), float(jnp.max(jnp.abs(out2 - ref2)))

    print("KERNEL_OK")
</pallas_src>

<mosaic_0001>
module attributes {stable_mosaic.version = 11 : i64} {
  func.func @_matmul_stats_kernel(%arg0: i32, %arg1: memref<128x128xbf16, #tpu.memory_space<vmem>>, %arg2: memref<128x128xbf16, #tpu.memory_space<vmem>>, %arg3: memref<1x128xf32, #tpu.memory_space<vmem>>, %arg4: memref<128x128xf32, #tpu.memory_space<vmem>>, %arg5: memref<2x128xf32, #tpu.memory_space<vmem>>) attributes {dimension_semantics = [#tpu.dimension_semantics<arbitrary>], iteration_bounds = array<i64: 1>, scalar_prefetch = 0 : i64, scratch_operands = 0 : i64, tpu.core_type = #tpu.core_type<tc>, window_params = [{transform_indices = @transform_0, window_bounds = array<i64: 128, 128>}, {pipeline_mode = #tpu.pipeline_mode<synchronous>, transform_indices = @transform_1, window_bounds = array<i64: 128, 128>}, {pipeline_mode = #tpu.pipeline_mode<synchronous>, transform_indices = @transform_2, window_bounds = array<i64: 1, 128>}, {transform_indices = @transform_3, window_bounds = array<i64: 128, 128>}, {pipeline_mode = #tpu.pipeline_mode<synchronous>, transform_indices = @transform_4, window_bounds = array<i64: 2, 128>}]} {
    %c0_i32 = arith.constant 0 : i32
    %0 = arith.cmpi eq, %arg0, %c0_i32 : i32
    %1 = arith.extui %0 : i1 to i32
    %c0_i32_0 = arith.constant 0 : i32
    %2 = arith.cmpi ne, %1, %c0_i32_0 : i32
    scf.if %2 {
      %cst_15 = arith.constant 0.000000e+00 : f32
      %25 = vector.broadcast %cst_15 : f32 to vector<2x128xf32>
      %c0_16 = arith.constant 0 : index
      %c0_17 = arith.constant 0 : index
      %26 = vector.load %arg5[%c0_16, %c0_17] : memref<2x128xf32, #tpu.memory_space<vmem>>, vector<2x128xf32>
      tpu.vector_store %arg5[%c0_16, %c0_17], %25 {strides = array<i32>} : memref<2x128xf32, #tpu.memory_space<vmem>>, vector<2x128xf32>,
    } else {
    }
    %c0 = arith.constant 0 : index
    %c0_1 = arith.constant 0 : index
    %3 = vector.load %arg1[%c0, %c0_1] : memref<128x128xbf16, #tpu.memory_space<vmem>>, vector<128x128xbf16>
    %c0_2 = arith.constant 0 : index
    %c0_3 = arith.constant 0 : index
    %4 = vector.load %arg2[%c0_2, %c0_3] : memref<128x128xbf16, #tpu.memory_space<vmem>>, vector<128x128xbf16>
    %cst = arith.constant dense<0.000000e+00> : vector<128x128xf32>
    %5 = tpu.matmul %3, %4, %cst {dimension_numbers = #tpu.dot_dimension_numbers<[1], [0], [0], [1], [0, 0, 1, 1], [], []>} : vector<128x128xbf16>, vector<128x128xbf16>, vector<128x128xf32> -> vector<128x128xf32>
    %c0_4 = arith.constant 0 : index
    %c0_5 = arith.constant 0 : index
    %6 = vector.load %arg3[%c0_4, %c0_5] : memref<1x128xf32, #tpu.memory_space<vmem>>, vector<1x128xf32>
    %7 = vector.broadcast %6 : vector<1x128xf32> to vector<128x128xf32>
    %8 = arith.addf %5, %7 : vector<128x128xf32>
    %c128_i32 = arith.constant 128 : i32
    %9 = arith.muli %arg0, %c128_i32 : i32
    %10 = tpu.iota {dimensions = array<i32: 1>} : vector<1x128xi32>
    %11 = vector.broadcast %9 : i32 to vector<1x128xi32>
    %12 = arith.addi %11, %10 : vector<1x128xi32>
    %c128_i32_6 = arith.constant 128 : i32
    %13 = vector.broadcast %c128_i32_6 : i32 to vector<1x128xi32>
    %14 = arith.cmpi slt, %12, %13 : vector<1x128xi32>
    %15 = arith.extui %14 : vector<1x128xi1> to vector<1x128xi32>
    %16 = arith.sitofp %15 : vector<1x128xi32> to vector<1x128xf32>
    %cst_7 = arith.constant dense<0.000000e+00> : vector<1x128xf32>
    %17 = tpu.matmul %16, %8, %cst_7 {dimension_numbers = #tpu.dot_dimension_numbers<[1], [0], [0], [1], [0, 0, 1, 1], [], []>} : vector<1x128xf32>, vector<128x128xf32>, vector<1x128xf32> -> vector<1x128xf32>
    %18 = arith.mulf %8, %8 : vector<128x128xf32>
    %cst_8 = arith.constant dense<0.000000e+00> : vector<1x128xf32>
    %19 = tpu.matmul %16, %18, %cst_8 {dimension_numbers = #tpu.dot_dimension_numbers<[1], [0], [0], [1], [0, 0, 1, 1], [], []>} : vector<1x128xf32>, vector<128x128xf32>, vector<1x128xf32> -> vector<1x128xf32>
    %c0_9 = arith.constant 0 : index
    %c0_10 = arith.constant 0 : index
    %20 = vector.load %arg5[%c0_9, %c0_10] : memref<2x128xf32, #tpu.memory_space<vmem>>, vector<2x128xf32>
    %21 = tpu.concatenate %17, %19 in 0 : vector<1x128xf32>, vector<1x128xf32> -> vector<2x128xf32>
    %22 = arith.addf %20, %21 : vector<2x128xf32>
    %c0_11 = arith.constant 0 : index
    %c0_12 = arith.constant 0 : index
    %23 = vector.load %arg5[%c0_11, %c0_12] : memref<2x128xf32, #tpu.memory_space<vmem>>, vector<2x128xf32>
    tpu.vector_store %arg5[%c0_11, %c0_12], %22 {strides = array<i32>} : memref<2x128xf32, #tpu.memory_space<vmem>>, vector<2x128xf32>,
    %c0_13 = arith.constant 0 : index
    %c0_14 = arith.constant 0 : index
    %24 = vector.load %arg4[%c0_13, %c0_14] : memref<128x128xf32, #tpu.memory_space<vmem>>, vector<128x128xf32>
    tpu.vector_store %arg4[%c0_13, %c0_14], %8 {strides = array<i32>} : memref<128x128xf32, #tpu.memory_space<vmem>>, vector<128x128xf32>,
    return
  }
  func.func @transform_0(%arg0: i32) -> (i32, i32) {
    %c0_i32 = arith.constant 0 : i32
    %c0_i32_0 = arith.constant 0 : i32
    return %arg0, %c0_i32 : i32, i32
  }
  func.func @transform_1(%arg0: i32) -> (i32, i32) {
    %c0_i32 = arith.constant 0 : i32
    %c0_i32_0 = arith.constant 0 : i32
    %c0_i32_1 = arith.constant 0 : i32
    return %c0_i32, %c0_i32_0 : i32, i32
  }
  func.func @transform_2(%arg0: i32) -> (i32, i32) {
    %c0_i32 = arith.constant 0 : i32
    %c0_i32_0 = arith.constant 0 : i32
    %c0_i32_1 = arith.constant 0 : i32
    return %c0_i32, %c0_i32_0 : i32, i32
  }
  func.func @transform_3(%arg0: i32) -> (i32, i32) {
    %c0_i32 = arith.constant 0 : i32
    %c0_i32_0 = arith.constant 0 : i32
    return %arg0, %c0_i32 : i32, i32
  }
  func.func @transform_4(%arg0: i32) -> (i32, i32) {
    %c0_i32 = arith.constant 0 : i32
    %c0_i32_0 = arith.constant 0 : i32
    %c0_i32_1 = arith.constant 0 : i32
    return %c0_i32, %c0_i32_0 : i32, i32
  }
}

</mosaic_0001>

<llo_original>
// kernel: tpu_custom_call.1
$region0: #{tpu_custom_call.1}
  #allocation0 [shape = 'u32[]', space=smem, size = 0x4, offset = 0x4, fixed_abs, tag = 'smem constant byte address 0x4 - core index']
  #allocation1 [shape = 'u32[144,128]{1,0:T(1,128)}', space=vmem, size = 0x12000, scoped, tag = 'internal scratch']
  %s0 = inlined_call_operand.hbm [shape: bf16[128,128], index: 0, kind: input, shape index: {}]
  %s1 = inlined_call_operand.hbm [shape: bf16[128,128], index: 1, kind: input, shape index: {}]
  %s2 = inlined_call_operand.vmem [shape: f32[1,128], index: 2, kind: input, shape index: {}]
  %s3 = inlined_call_operand.hbm [shape: f32[128,128], index: 3, kind: output, shape index: {0}]
  %s4 = inlined_call_operand.hbm [shape: f32[2,128], index: 4, kind: output, shape index: {1}]
  %5 = xla_tuple %s3, %s4
  %s6 = sld [smem:[#allocation0]]
  $region42: #{tpu_custom_call.1} parent=0
    _
  %s8 = ssub.s32 1, %s6
  %s9 = scalar_select 0, %s8, %s6
  $region1: #{tpu_custom_call.1} parent=0
    #allocation2 [shape = 'u8[32768]{0}', space=vmem, size = 0x8000, scoped, tag = 'input window, operand 0, single buffered']
    #allocation3 [shape = 's32[1]{0}', space=sflag, size = 0x4, scoped, tag = 'scoped memory for tpu_custom_call.1']
    #allocation4 [shape = 's32[1]{0}', space=sflag, size = 0x4, scoped, tag = 'scoped memory for tpu_custom_call.1']
    #allocation5 [shape = 'u8[32768]{0}', space=vmem, size = 0x8000, scoped, tag = 'input window, operand 1, single buffered']
    #allocation6 [shape = 's32[1]{0}', space=sflag, size = 0x4, scoped, tag = 'scoped memory for tpu_custom_call.1']
    #allocation7 [shape = 'u8[65536]{0}', space=vmem, size = 0x10000, scoped, tag = 'output window, operand 0, single buffered']
    #allocation8 [shape = 'u8[1024]{0}', space=vmem, size = 0x400, scoped, tag = 'output window, operand 1, single buffered']
    #allocation9 [shape = 's32[1]{0}', space=sflag, size = 0x4, scoped, tag = 'scoped memory for tpu_custom_call.1']
    %10 = vsyncpa [#allocation3], 0
    %11 = vsyncpa [#allocation6], 0
    %12 = vsyncpa [#allocation4], 0
    %13 = vsyncpa [#allocation9], 0
    // Predicated region
    $region2: #{tpu_custom_call.1} parent=1 // pred_check
      _
    $region3: #{tpu_custom_call.1} parent=1 // pred_check_branch
      %15 = sbr.rel (0) target = $region5
    $region4: #{tpu_custom_call.1} parent=1 // pred_region
      %s17 = ssub.s32 1024, 1024
      %18 = vsyncadd [#allocation3], %s17
      %s19 = sshll.u32 [#allocation2], 4
      %s20 = int_to_ptr.vmem [resolvable:$true] %s19
      %25 = dma.hbm_to_vmem [thread:$0]  %s0, 1024, %s20, [#allocation3], 64, 64, 4
    $region5: #{tpu_custom_call.1} parent=1 // pred_fallthru
      _
    // Predicated region
    $region6: #{tpu_custom_call.1} parent=1 // pred_check
      _
    $region7: #{tpu_custom_call.1} parent=1 // pred_check_branch
      %27 = sbr.rel (0) target = $region9
    $region8: #{tpu_custom_call.1} parent=1 // pred_region
      %s29 = ssub.s32 1024, 1024
      %30 = vsyncadd [#allocation6], %s29
      %s31 = sshll.u32 [#allocation5], 4
      %s32 = int_to_ptr.vmem [resolvable:$true] %s31
      %37 = dma.hbm_to_vmem [thread:$0]  %s1, 1024, %s32, [#allocation6], 64, 64, 4
    $region9: #{tpu_custom_call.1} parent=1 // pred_fallthru
      _
    // Predicated region
    $region10: #{tpu_custom_call.1} parent=1 // pred_check
      _
    $region11: #{tpu_custom_call.1} parent=1 // pred_check_branch
      %39 = sbr.rel (0) target = $region13
    $region12: #{tpu_custom_call.1} parent=1 // pred_region
      _
    $region13: #{tpu_custom_call.1} parent=1 // pred_fallthru
      _
    // Predicated region
    $region14: #{tpu_custom_call.1} parent=1 // pred_check
      _
    $region15: #{tpu_custom_call.1} parent=1 // pred_check_branch
      %41 = sbr.rel (0) target = $region17
    $region16: #{tpu_custom_call.1} parent=1 // pred_region
      %42 = dma.done [#allocation3], 1024
    $region17: #{tpu_custom_call.1} parent=1 // pred_fallthru
      _
    // Predicated region
    $region18: #{tpu_custom_call.1} parent=1 // pred_check
      _
    $region19: #{tpu_custom_call.1} parent=1 // pred_check_branch
      %44 = sbr.rel (0) target = $region21
    $region20: #{tpu_custom_call.1} parent=1 // pred_region
      %45 = dma.done [#allocation6], 1024
    $region21: #{tpu_custom_call.1} parent=1 // pred_fallthru
      _
    %p47 = scmp.eq.s32.totalorder 0, 0
    // Predicated region
    $region22: #{tpu_custom_call.1} parent=1 // pred_check
      %p48 = pneg %p47
    $region23: #{tpu_custom_call.1} parent=1 // pred_check_branch
      %50 = sbr.rel (%p48) target = $region25
    $region24: #{tpu_custom_call.1} parent=1 // pred_region
      %51 = vst [vmem:[#allocation8] sm:$0x3] 0.0
    $region25: #{tpu_custom_call.1} parent=1 // pred_fallthru
      _
    %v52 = vld [vmem:[#allocation2] sm:$0xf]
    %v53 = vld [vmem:[#allocation2 + $0x4] sm:$0xf]
    %v54 = vld [vmem:[#allocation2 + $0x8] sm:$0xf]
    %v55 = vld [vmem:[#allocation2 + $0xc] sm:$0xf]
    %v56 = vld [vmem:[#allocation2 + $0x10] sm:$0xf]
    %v57 = vld [vmem:[#allocation2 + $0x14] sm:$0xf]
    %v58 = vld [vmem:[#allocation2 + $0x18] sm:$0xf]
    %v59 = vld [vmem:[#allocation2 + $0x1c] sm:$0xf]
    %v60 = vld [vmem:[#allocation2 + $0x20] sm:$0xf]
    %v61 = vld [vmem:[#allocation2 + $0x24] sm:$0xf]
    %v62 = vld [vmem:[#allocation2 + $0x28] sm:$0xf]
    %v63 = vld [vmem:[#allocation2 + $0x2c] sm:$0xf]
    %v64 = vld [vmem:[#allocation2 + $0x30] sm:$0xf]
    %v65 = vld [vmem:[#allocation2 + $0x34] sm:$0xf]
    %v66 = vld [vmem:[#allocation2 + $0x38] sm:$0xf]
    %v67 = vld [vmem:[#allocation2 + $0x3c] sm:$0xf]
    %v68 = vld [vmem:[#allocation5] sm:$0xf]
    %v69 = vld [vmem:[#allocation5 + $0x4] sm:$0xf]
    %v70 = vld [vmem:[#allocation5 + $0x8] sm:$0xf]
    %v71 = vld [vmem:[#allocation5 + $0xc] sm:$0xf]
    %v72 = vld [vmem:[#allocation5 + $0x10] sm:$0xf]
    %v73 = vld [vmem:[#allocation5 + $0x14] sm:$0xf]
    %v74 = vld [vmem:[#allocation5 + $0x18] sm:$0xf]
    %v75 = vld [vmem:[#allocation5 + $0x1c] sm:$0xf]
    %v76 = vld [vmem:[#allocation5 + $0x20] sm:$0xf]
    %v77 = vld [vmem:[#allocation5 + $0x24] sm:$0xf]
    %v78 = vld [vmem:[#allocation5 + $0x28] sm:$0xf]
    %v79 = vld [vmem:[#allocation5 + $0x2c] sm:$0xf]
    %v80 = vld [vmem:[#allocation5 + $0x30] sm:$0xf]
    %v81 = vld [vmem:[#allocation5 + $0x34] sm:$0xf]
    %v82 = vld [vmem:[#allocation5 + $0x38] sm:$0xf]
    %v83 = vld [vmem:[#allocation5 + $0x3c] sm:$0xf]
    %v84 = vld [vmem:[%s2] sm:$0x1]
    %v86 = vlaneseq
    %v87 = vshrl.u32 %v86, 7
    %v88 = vsub.s32 0, %v87
    %v89 = vrot.slane %v84, %v88
    %v107 = vunpack.c.l.b16 %v52
    %v108 = vunpack.c.l.b16 %v53
    %v109 = vunpack.c.l.b16 %v54
    %v110 = vunpack.c.l.b16 %v55
    %v111 = vunpack.c.l.b16 %v56
    %v112 = vunpack.c.l.b16 %v57
    %v113 = vunpack.c.l.b16 %v58
    %v114 = vunpack.c.l.b16 %v59
    %v115 = vunpack.c.l.b16 %v60
    %v116 = vunpack.c.l.b16 %v61
    %v117 = vunpack.c.l.b16 %v62
    %v118 = vunpack.c.l.b16 %v63
    %v119 = vunpack.c.l.b16 %v64
    %v120 = vunpack.c.l.b16 %v65
    %v121 = vunpack.c.l.b16 %v66
    %v122 = vunpack.c.l.b16 %v67
    %v123 = vpack.c.b16 %v108, %v107
    %v124 = vpack.c.b16 %v110, %v109
    %v125 = vpack.c.b16 %v112, %v111
    %v126 = vpack.c.b16 %v114, %v113
    %v127 = vpack.c.b16 %v116, %v115
    %v128 = vpack.c.b16 %v118, %v117
    %v129 = vpack.c.b16 %v120, %v119
    %v130 = vpack.c.b16 %v122, %v121
    %v155 = vunpack.c.l.b16 %v68
    %v156 = vunpack.c.l.b16 %v69
    %v157 = vunpack.c.l.b16 %v70
    %v158 = vunpack.c.l.b16 %v71
    %v159 = vunpack.c.l.b16 %v72
    %v160 = vunpack.c.l.b16 %v73
    %v161 = vunpack.c.l.b16 %v74
    %v162 = vunpack.c.l.b16 %v75
    %v163 = vunpack.c.l.b16 %v76
    %v164 = vunpack.c.l.b16 %v77
    %v165 = vunpack.c.l.b16 %v78
    %v166 = vunpack.c.l.b16 %v79
    %v167 = vunpack.c.l.b16 %v80
    %v168 = vunpack.c.l.b16 %v81
    %v169 = vunpack.c.l.b16 %v82
    %v170 = vunpack.c.l.b16 %v83
    %v171 = vpack.c.b16 %v156, %v155
    %v172 = vpack.c.b16 %v158, %v157
    %v173 = vpack.c.b16 %v160, %v159
    %v174 = vpack.c.b16 %v162, %v161
    %v175 = vpack.c.b16 %v164, %v163
    %v176 = vpack.c.b16 %v166, %v165
    %v177 = vpack.c.b16 %v168, %v167
    %v178 = vpack.c.b16 %v170, %v169
    %187 = vmatprep.subr.bf16.mxu0 0
    %188 = vmatpush1.bf16.msra.mxu0 %v171
    %189 = vmatprep.subr.bf16.mxu0 0
    %190 = vmatpush1.bf16.msra.mxu0 %v172
    %191 = vmatprep.subr.bf16.mxu0 0
    %192 = vmatpush1.bf16.msra.mxu0 %v173
    %193 = vmatprep.subr.bf16.mxu0 0
    %194 = vmatpush1.bf16.msra.mxu0 %v174
    %195 = vmatprep.subr.bf16.mxu0 0
    %196 = vmatpush1.bf16.msra.mxu0 %v175
    %197 = vmatprep.subr.bf16.mxu0 0
    %198 = vmatpush1.bf16.msra.mxu0 %v176
    %199 = vmatprep.subr.bf16.mxu0 0
    %200 = vmatpush1.bf16.msra.mxu0 %v177
    %201 = vmatprep.subr.bf16.mxu0 0
    %202 = vmatpush1.bf16.msra.mxu0 %v178
    %203 = vmatprep.subr.bf16.mxu0 0
    %204 = vmatpush1.bf16.msra.mxu0 0
    %205 = vmatprep.subr.bf16.mxu0 0
    %206 = vmatpush1.bf16.msra.mxu0 0
    %207 = vmatprep.subr.bf16.mxu0 0
    %208 = vmatpush1.bf16.msra.mxu0 0
    %209 = vmatprep.subr.bf16.mxu0 0
    %210 = vmatpush1.bf16.msra.mxu0 0
    %211 = vmatprep.subr.bf16.mxu0 0
    %212 = vmatpush1.bf16.msra.mxu0 0
    %213 = vmatprep.subr.bf16.mxu0 0
    %214 = vmatpush1.bf16.msra.mxu0 0
    %215 = vmatprep.subr.bf16.mxu0 0
    %216 = vmatpush1.bf16.msra.mxu0 0
    %217 = vmatprep.subr.bf16.mxu0 0
    %218 = vmatpush1.bf16.msra.mxu0 0
    %219 = vmatprep.mubr.bf16.mxu0 0
    %220 = vmatmul.mubr.bf16.gmra.mrb[0].mxu0 %v123
    %v221 = vpop.f32.mrb[0].mxu0
    %v222 = vadd.f32 %v89, %v221
    %v223 = vpop.f32.mrb[0].mxu0
    %v224 = vpop.f32.mrb[0].mxu0
    %v225 = vadd.f32 %v89, %v224
    %v226 = vpop.f32.mrb[0].mxu0
    %227 = vmatprep.mubr.bf16.mxu0 0
    %228 = vmatmul.mubr.bf16.gmra.mrb[0].mxu0 %v124
    %v229 = vpop.f32.mrb[0].mxu0
    %v230 = vadd.f32 %v89, %v229
    %v231 = vpop.f32.mrb[0].mxu0
    %v232 = vpop.f32.mrb[0].mxu0
    %v233 = vadd.f32 %v89, %v232
    %v234 = vpop.f32.mrb[0].mxu0
    %235 = vmatprep.mubr.bf16.mxu0 0
    %236 = vmatmul.mubr.bf16.gmra.mrb[0].mxu0 %v125
    %v237 = vpop.f32.mrb[0].mxu0
    %v238 = vadd.f32 %v89, %v237
    %v239 = vpop.f32.mrb[0].mxu0
    %v240 = vpop.f32.mrb[0].mxu0
    %v241 = vadd.f32 %v89, %v240
    %v242 = vpop.f32.mrb[0].mxu0
    %243 = vmatprep.mubr.bf16.mxu0 0
    %244 = vmatmul.mubr.bf16.gmra.mrb[0].mxu0 %v126
    %v245 = vpop.f32.mrb[0].mxu0
    %v246 = vadd.f32 %v89, %v245
    %v247 = vpop.f32.mrb[0].mxu0
    %v248 = vpop.f32.mrb[0].mxu0
    %v249 = vadd.f32 %v89, %v248
    %v250 = vpop.f32.mrb[0].mxu0
    %251 = vmatprep.mubr.bf16.mxu0 0
    %252 = vmatmul.mubr.bf16.gmra.mrb[0].mxu0 %v127
    %v253 = vpop.f32.mrb[0].mxu0
    %v254 = vadd.f32 %v89, %v253
    %v255 = vpop.f32.mrb[0].mxu0
    %v256 = vpop.f32.mrb[0].mxu0
    %v257 = vadd.f32 %v89, %v256
    %v258 = vpop.f32.mrb[0].mxu0
    %259 = vmatprep.mubr.bf16.mxu0 0
    %260 = vmatmul.mubr.bf16.gmra.mrb[0].mxu0 %v128
    %v261 = vpop.f32.mrb[0].mxu0
    %v262 = vadd.f32 %v89, %v261
    %v263 = vpop.f32.mrb[0].mxu0
    %v264 = vpop.f32.mrb[0].mxu0
    %v265 = vadd.f32 %v89, %v264
    %v266 = vpop.f32.mrb[0].mxu0
    %267 = vmatprep.mubr.bf16.mxu0 0
    %268 = vmatmul.mubr.bf16.gmra.mrb[0].mxu0 %v129
    %v269 = vpop.f32.mrb[0].mxu0
    %v270 = vadd.f32 %v89, %v269
    %v271 = vpop.f32.mrb[0].mxu0
    %v272 = vpop.f32.mrb[0].mxu0
    %v273 = vadd.f32 %v89, %v272
    %v274 = vpop.f32.mrb[0].mxu0
    %275 = vmatprep.mubr.bf16.mxu0 0
    %276 = vmatmul.mubr.bf16.gmra.mrb[0].mxu0 %v130
    %v277 = vpop.f32.mrb[0].mxu0
    %v278 = vadd.f32 %v89, %v277
    %v279 = vpop.f32.mrb[0].mxu0
    %v280 = vpop.f32.mrb[0].mxu0
    %v281 = vadd.f32 %v89, %v280
    %v282 = vpop.f32.mrb[0].mxu0
    %283 = vdwg.mxu0
    %s284 = smul.u32 0, 128
    %v285 = vlaneseq
    %v286 = vand.u32 %v285, 127
    %v287 = vstv %s284
    %v288 = vadd.s32 %v287, %v286
    %vm289 = vcmp.lt.s32.totalorder %v288, 128
    %v290 = vsel %vm289, 1, 0
    %v291 = vcvt.s32.f32 %v290
    %292 = vmatprep.subr.mxu0 0.0
    %293 = vmatpush1.msra.mxu0 %v222
    %294 = vmatprep.subr.mxu0 0.0
    %295 = vmatpush1.msra.mxu0 %v225
    %296 = vmatprep.subr.mxu0 0.0
    %297 = vmatpush1.msra.mxu0 %v230
    %298 = vmatprep.subr.mxu0 0.0
    %299 = vmatpush1.msra.mxu0 %v233
    %300 = vmatprep.subr.mxu0 0.0
    %301 = vmatpush1.msra.mxu0 %v238
    %302 = vmatprep.subr.mxu0 0.0
    %303 = vmatpush1.msra.mxu0 %v241
    %304 = vmatprep.subr.mxu0 0.0
    %305 = vmatpush1.msra.mxu0 %v246
    %306 = vmatprep.subr.mxu0 0.0
    %307 = vmatpush1.msra.mxu0 %v249
    %308 = vmatprep.subr.mxu0 0.0
    %309 = vmatpush1.msra.mxu0 %v254
    %310 = vmatprep.subr.mxu0 0.0
    %311 = vmatpush1.msra.mxu0 %v257
    %312 = vmatprep.subr.mxu0 0.0
    %313 = vmatpush1.msra.mxu0 %v262
    %314 = vmatprep.subr.mxu0 0.0
    %315 = vmatpush1.msra.mxu0 %v265
    %316 = vmatprep.subr.mxu0 0.0
    %317 = vmatpush1.msra.mxu0 %v270
    %318 = vmatprep.subr.mxu0 0.0
    %319 = vmatpush1.msra.mxu0 %v273
    %320 = vmatprep.subr.mxu0 0.0
    %321 = vmatpush1.msra.mxu0 %v278
    %322 = vmatprep.subr.mxu0 0.0
    %323 = vmatpush1.msra.mxu0 %v281
    %324 = vmatprep.subr.mxu0 0.0
    %325 = vmatpush1.msra.mxu0 0.0
    %326 = vmatprep.subr.mxu0 0.0
    %327 = vmatpush1.msra.mxu0 0.0
    %328 = vmatprep.subr.mxu0 0.0
    %329 = vmatpush1.msra.mxu0 0.0
    %330 = vmatprep.subr.mxu0 0.0
    %331 = vmatpush1.msra.mxu0 0.0
    %332 = vmatprep.subr.mxu0 0.0
    %333 = vmatpush1.msra.mxu0 0.0
    %334 = vmatprep.subr.mxu0 0.0
    %335 = vmatpush1.msra.mxu0 0.0
    %336 = vmatprep.subr.mxu0 0.0
    %337 = vmatpush1.msra.mxu0 0.0
    %338 = vmatprep.subr.mxu0 0.0
    %339 = vmatpush1.msra.mxu0 0.0
    %340 = vmatprep.subr.mxu0 0.0
    %341 = vmatpush1.msra.mxu0 0.0
    %342 = vmatprep.subr.mxu0 0.0
    %343 = vmatpush1.msra.mxu0 0.0
    %344 = vmatprep.subr.mxu0 0.0
    %345 = vmatpush1.msra.mxu0 0.0
    %346 = vmatprep.subr.mxu0 0.0
    %347 = vmatpush1.msra.mxu0 0.0
    %348 = vmatprep.subr.mxu0 0.0
    %349 = vmatpush1.msra.mxu0 0.0
    %350 = vmatprep.subr.mxu0 0.0
    %351 = vmatpush1.msra.mxu0 0.0
    %352 = vmatprep.subr.mxu0 0.0
    %353 = vmatpush1.msra.mxu0 0.0
    %354 = vmatprep.subr.mxu0 0.0
    %355 = vmatpush1.msra.mxu0 0.0
    %356 = vmatprep.mubr.f32.mxu0 0.0
    %357 = vmatmul.mubr.f32.gmra.mrb[0].mxu0 %v291
    %v358 = vpop.f32.mrb[0].mxu0
    %v359 = vadd.f32 0.0, %v358
    %v360 = vpop.f32.mrb[0].mxu0
    %361 = vdwg.mxu0
    %v362 = vmul.f32 %v222, %v222
    %v363 = vmul.f32 %v225, %v225
    %v364 = vmul.f32 %v230, %v230
    %v365 = vmul.f32 %v233, %v233
    %v366 = vmul.f32 %v238, %v238
    %v367 = vmul.f32 %v241, %v241
    %v368 = vmul.f32 %v246, %v246
    %v369 = vmul.f32 %v249, %v249
    %v370 = vmul.f32 %v254, %v254
    %v371 = vmul.f32 %v257, %v257
    %v372 = vmul.f32 %v262, %v262
    %v373 = vmul.f32 %v265, %v265
    %v374 = vmul.f32 %v270, %v270
    %v375 = vmul.f32 %v273, %v273
    %v376 = vmul.f32 %v278, %v278
    %v377 = vmul.f32 %v281, %v281
    %378 = vmatprep.subr.mxu0 0.0
    %379 = vmatpush1.msra.mxu0 %v362
    %380 = vmatprep.subr.mxu0 0.0
    %381 = vmatpush1.msra.mxu0 %v363
    %382 = vmatprep.subr.mxu0 0.0
    %383 = vmatpush1.msra.mxu0 %v364
    %384 = vmatprep.subr.mxu0 0.0
    %385 = vmatpush1.msra.mxu0 %v365
    %386 = vmatprep.subr.mxu0 0.0
    %387 = vmatpush1.msra.mxu0 %v366
    %388 = vmatprep.subr.mxu0 0.0
    %389 = vmatpush1.msra.mxu0 %v367
    %390 = vmatprep.subr.mxu0 0.0
    %391 = vmatpush1.msra.mxu0 %v368
    %392 = vmatprep.subr.mxu0 0.0
    %393 = vmatpush1.msra.mxu0 %v369
    %394 = vmatprep.subr.mxu0 0.0
    %395 = vmatpush1.msra.mxu0 %v370
    %396 = vmatprep.subr.mxu0 0.0
    %397 = vmatpush1.msra.mxu0 %v371
    %398 = vmatprep.subr.mxu0 0.0
    %399 = vmatpush1.msra.mxu0 %v372
    %400 = vmatprep.subr.mxu0 0.0
    %401 = vmatpush1.msra.mxu0 %v373
    %402 = vmatprep.subr.mxu0 0.0
    %403 = vmatpush1.msra.mxu0 %v374
    %404 = vmatprep.subr.mxu0 0.0
    %405 = vmatpush1.msra.mxu0 %v375
    %406 = vmatprep.subr.mxu0 0.0
    %407 = vmatpush1.msra.mxu0 %v376
    %408 = vmatprep.subr.mxu0 0.0
    %409 = vmatpush1.msra.mxu0 %v377
    %410 = vmatprep.subr.mxu0 0.0
    %411 = vmatpush1.msra.mxu0 0.0
    %412 = vmatprep.subr.mxu0 0.0
    %413 = vmatpush1.msra.mxu0 0.0
    %414 = vmatprep.subr.mxu0 0.0
    %415 = vmatpush1.msra.mxu0 0.0
    %416 = vmatprep.subr.mxu0 0.0
    %417 = vmatpush1.msra.mxu0 0.0
    %418 = vmatprep.subr.mxu0 0.0
    %419 = vmatpush1.msra.mxu0 0.0
    %420 = vmatprep.subr.mxu0 0.0
    %421 = vmatpush1.msra.mxu0 0.0
    %422 = vmatprep.subr.mxu0 0.0
    %423 = vmatpush1.msra.mxu0 0.0
    %424 = vmatprep.subr.mxu0 0.0
    %425 = vmatpush1.msra.mxu0 0.0
    %426 = vmatprep.subr.mxu0 0.0
    %427 = vmatpush1.msra.mxu0 0.0
    %428 = vmatprep.subr.mxu0 0.0
    %429 = vmatpush1.msra.mxu0 0.0
    %430 = vmatprep.subr.mxu0 0.0
    %431 = vmatpush1.msra.mxu0 0.0
    %432 = vmatprep.subr.mxu0 0.0
    %433 = vmatpush1.msra.mxu0 0.0
    %434 = vmatprep.subr.mxu0 0.0
    %435 = vmatpush1.msra.mxu0 0.0
    %436 = vmatprep.subr.mxu0 0.0
    %437 = vmatpush1.msra.mxu0 0.0
    %438 = vmatprep.subr.mxu0 0.0
    %439 = vmatpush1.msra.mxu0 0.0
    %440 = vmatprep.subr.mxu0 0.0
    %441 = vmatpush1.msra.mxu0 0.0
    %442 = vmatprep.mubr.f32.mxu0 0.0
    %443 = vmatmul.mubr.f32.gmra.mrb[0].mxu0 %v291
    %v444 = vpop.f32.mrb[0].mxu0
    %v445 = vadd.f32 0.0, %v444
    %v446 = vpop.f32.mrb[0].mxu0
    %447 = vdwg.mxu0
    %v448 = vld [vmem:[#allocation8] sm:$0x3]
    %v450 = vrot.slane %v445, 7
    %vm452 = vcmask 1040384
    %v453 = vsel %vm452, %v359, %v450
    %v454 = vadd.f32 %v448, %v453
    %455 = vst [vmem:[#allocation8] sm:$0x3] %v454
    %456 = vst [vmem:[#allocation7] sm:$0xff] %v222
    %457 = vst [vmem:[#allocation7 + $0x8] sm:$0xff] %v225
    %458 = vst [vmem:[#allocation7 + $0x10] sm:$0xff] %v230
    %459 = vst [vmem:[#allocation7 + $0x18] sm:$0xff] %v233
    %460 = vst [vmem:[#allocation7 + $0x20] sm:$0xff] %v238
    %461 = vst [vmem:[#allocation7 + $0x28] sm:$0xff] %v241
    %462 = vst [vmem:[#allocation7 + $0x30] sm:$0xff] %v246
    %463 = vst [vmem:[#allocation7 + $0x38] sm:$0xff] %v249
    %464 = vst [vmem:[#allocation7 + $0x40] sm:$0xff] %v254
    %465 = vst [vmem:[#allocation7 + $0x48] sm:$0xff] %v257
    %466 = vst [vmem:[#allocation7 + $0x50] sm:$0xff] %v262
    %467 = vst [vmem:[#allocation7 + $0x58] sm:$0xff] %v265
    %468 = vst [vmem:[#allocation7 + $0x60] sm:$0xff] %v270
    %469 = vst [vmem:[#allocation7 + $0x68] sm:$0xff] %v273
    %470 = vst [vmem:[#allocation7 + $0x70] sm:$0xff] %v278
    %471 = vst [vmem:[#allocation7 + $0x78] sm:$0xff] %v281
    // Predicated region
    $region26: #{tpu_custom_call.1} parent=1 // pred_check
      _
    $region27: #{tpu_custom_call.1} parent=1 // pred_check_branch
      %473 = sbr.rel (0) target = $region29
    $region28: #{tpu_custom_call.1} parent=1 // pred_region
      %s475 = ssub.s32 2048, 2048
      %476 = vsyncadd [#allocation4], %s475
      %s477 = sshll.u32 [#allocation7], 4
      %s478 = int_to_ptr.vmem [resolvable:$true] %s477
      %483 = dma.vmem_to_hbm [thread:$0]  %s478, 2048, %s3, [#allocation4], 128, 128, 8
    $region29: #{tpu_custom_call.1} parent=1 // pred_fallthru
      _
    // Predicated region
    $region30: #{tpu_custom_call.1} parent=1 // pred_check
      _
    $region31: #{tpu_custom_call.1} parent=1 // pred_check_branch
      %485 = sbr.rel (0) target = $region33
    $region32: #{tpu_custom_call.1} parent=1 // pred_region
      %s487 = ssub.s32 32, 32
      %488 = vsyncadd [#allocation9], %s487
      %s490 = sshll.u32 [#allocation8], 4
      %s491 = int_to_ptr.vmem [resolvable:$true] %s490
      %493 = dma.vmem_to_hbm [thread:$0]  %s491, 32, %s4, [#allocation9]
    $region33: #{tpu_custom_call.1} parent=1 // pred_fallthru
      _
    // Predicated region
    $region34: #{tpu_custom_call.1} parent=1 // pred_check
      _
    $region35: #{tpu_custom_call.1} parent=1 // pred_check_branch
      %495 = sbr.rel (0) target = $region37
    $region36: #{tpu_custom_call.1} parent=1 // pred_region
      %496 = dma.done [#allocation4], 2048
    $region37: #{tpu_custom_call.1} parent=1 // pred_fallthru
      _
    // Predicated region
    $region38: #{tpu_custom_call.1} parent=1 // pred_check
      _
    $region39: #{tpu_custom_call.1} parent=1 // pred_check_branch
      %498 = sbr.rel (0) target = $region41
    $region40: #{tpu_custom_call.1} parent=1 // pred_region
      %499 = dma.done [#allocation9], 32
    $region41: #{tpu_custom_call.1} parent=1 // pred_fallthru
      _
    %500 = vsyncpa [#allocation3], 1
    %501 = vsyncpa [#allocation6], 1
    %502 = vsyncpa [#allocation4], 1
    %503 = vsyncpa [#allocation9], 1

</llo_original>
